<compile_context>
chip_gen: v7x
topology: tpu7x:2x2x1
jax: 0.10.0
libtpu: 0.0.40
codegen_flags: <defaults>
</compile_context>

<pallas_src>
import functools
import math

import jax
import jax.numpy as jnp
from jax.experimental import pallas as pl
from jax.experimental.pallas import tpu as pltpu


# --------------------------------------------------------------------------
# Shared in-kernel helpers (flat lane-dense layout: channel = lane % C)
# --------------------------------------------------------------------------

def _lane_group_allreduce(v, c, l):
    """Sum a (1, L) vector over lanes within each residue class mod C.

    After this, every lane holds the total of its channel. L // C is a power of
    two by construction (L = lcm(C, 128)), so a doubling sequence of XLU lane
    rotations finishes in log2(L // C) steps (XLU slot => essentially free).
    """
    shift = c
    while shift < l:
        v = v + pltpu.roll(v, shift=shift, axis=1)
        shift *= 2
    return v


def _finalize_scale_shift(s, ss, gamma_lane, beta_lane, *, c, l, eps, m_total):
    """Fused per-lane affine: scale = gamma*rsqrt(var+eps), shift = beta - mean*scale."""
    ch_sum = _lane_group_allreduce(s, c, l)
    ch_sumsq = _lane_group_allreduce(ss, c, l)
    inv_m = 1.0 / m_total
    mean = ch_sum * inv_m
    var = ch_sumsq * inv_m - mean * mean          # biased batch variance
    inv = jax.lax.rsqrt(var + eps)
    scale = gamma_lane * inv
    shift = beta_lane - mean * scale
    return scale, shift


# --------------------------------------------------------------------------
# Kernels — flat lane-dense path
# --------------------------------------------------------------------------

def _bn_stats_kernel(x_ref, gamma_ref, beta_ref, scale_ref, shift_ref,
                     sum_ref, sumsq_ref, *, c, l, eps, m_total):
    """Pass 1: accumulate per-lane sum / sum-of-squares; finalize scale/shift."""
    i = pl.program_id(0)

    @pl.when(i == 0)
    def _():
        sum_ref[...] = jnp.zeros_like(sum_ref)
        sumsq_ref[...] = jnp.zeros_like(sumsq_ref)

    x = x_ref[...].astype(jnp.float32)                         # (TR, L) lane-dense
    sum_ref[...] += jnp.sum(x, axis=0, keepdims=True)          # (1, L)
    sumsq_ref[...] += jnp.sum(x * x, axis=0, keepdims=True)    # (1, L)

    @pl.when(i == pl.num_programs(0) - 1)
    def _():
        scale, shift = _finalize_scale_shift(
            sum_ref[...], sumsq_ref[...],
            gamma_ref[...], beta_ref[...],
            c=c, l=l, eps=eps, m_total=m_total)
        scale_ref[...] = scale
        shift_ref[...] = shift


def _bn_apply_kernel(x_ref, scale_ref, shift_ref, o_ref):
    """Pass 2: y = x * scale + shift (broadcast), tile-parallel.

    Layout-agnostic: works for (TR, L) x with (1, L) scale/shift (flat path) and
    for (C, TM) x with (C, 1) scale/shift (transposed fallback path).
    """
    x = x_ref[...].astype(jnp.float32)
    o_ref[...] = (x * scale_ref[...] + shift_ref[...]).astype(o_ref.dtype)


def _bn_fused_kernel(x_ref, gamma_ref, beta_ref, o_ref, *, c, l, eps, m_total):
    """Single-block fused kernel: stats + normalize with one HBM read of x."""
    x = x_ref[...].astype(jnp.float32)                         # (R, L)
    s = jnp.sum(x, axis=0, keepdims=True)
    ss = jnp.sum(x * x, axis=0, keepdims=True)
    scale, shift = _finalize_scale_shift(
        s, ss, gamma_ref[...], beta_ref[...], c=c, l=l, eps=eps, m_total=m_total)
    o_ref[...] = (x * scale + shift).astype(o_ref.dtype)


# --------------------------------------------------------------------------
# Kernels — transposed (C, M) fallback path
# --------------------------------------------------------------------------

def _bn_stats_t_kernel(x_ref, gamma_ref, beta_ref, scale_ref, shift_ref,
                       sum_ref, sumsq_ref, *, eps, m_total):
    i = pl.program_id(0)

    @pl.when(i == 0)
    def _():
        sum_ref[...] = jnp.zeros_like(sum_ref)
        sumsq_ref[...] = jnp.zeros_like(sumsq_ref)

    x = x_ref[...].astype(jnp.float32)                         # (C, TM)
    sum_ref[...] += jnp.sum(x, axis=-1, keepdims=True)         # (C, 1)
    sumsq_ref[...] += jnp.sum(x * x, axis=-1, keepdims=True)

    @pl.when(i == pl.num_programs(0) - 1)
    def _():
        inv_m = 1.0 / m_total
        mean = sum_ref[...] * inv_m
        var = sumsq_ref[...] * inv_m - mean * mean
        inv = jax.lax.rsqrt(var + eps)
        scale = gamma_ref[...].astype(jnp.float32) * inv
        shift = beta_ref[...].astype(jnp.float32) - mean * scale
        scale_ref[...] = scale
        shift_ref[...] = shift


# --------------------------------------------------------------------------
# Tiling / layout choices
# --------------------------------------------------------------------------

def _flat_layout(total, c, itemsize, max_tile_rows=None):
    """Pick (R, L, TR) for the lane-dense flat view, or None if not expressible."""
    l = 128 * c // math.gcd(c, 128)            # smallest multiple of both 128 and C
    if l > 2048 or total % l != 0:
        return None
    r = total // l
    if r % 8 != 0:
        # Single full block is allowed regardless of (8,128) — only if it fits VMEM.
        if r * l * itemsize > (8 << 20):
            return None
        return r, l, r
    budget_rows = max(8, (4 << 20) // (l * itemsize))
    cap = (budget_rows // 8) * 8
    if max_tile_rows is not None:
        cap = max(8, min(cap, max_tile_rows))
    tr = max(8, (min(cap, r) // 8) * 8)
    while tr > 8 and r % tr != 0:
        tr -= 8
    return r, l, tr


def _pick_tile_m(m, c, itemsize, max_bytes_per_buf=4 << 20):
    """(fallback path) largest multiple-of-128 tile dividing M within the budget."""
    if m < 128 or (m % 128) != 0:
        return m                               # single full block
    cap = max(128, ((max_bytes_per_buf // max(1, c * itemsize)) // 128) * 128)
    t = (min(cap, m) // 128) * 128
    while t >= 128:
        if m % t == 0:
            return t
        t -= 128
    return 128


# --------------------------------------------------------------------------
# Wrappers
# --------------------------------------------------------------------------

_VMEM_LIMIT = 32 << 20  # conservative across v5e / v6e / v7x scoped defaults


def _batch_normalization_transposed(x, gamma, beta, *, eps):
    """Fallback for shapes the flat lane-dense layout cannot express."""
    shape = x.shape
    C = shape[-1]
    M = x.size // C
    x_cm = x.reshape(M, C).T                                   # (C, M) layout glue
    gamma2d = gamma.reshape(C, 1).astype(jnp.float32)
    beta2d = beta.reshape(C, 1).astype(jnp.float32)

    tm = _pick_tile_m(M, C, jnp.dtype(x.dtype).itemsize)
    n_tiles = M // tm

    scale, shift = pl.pallas_call(
        functools.partial(_bn_stats_t_kernel, eps=eps, m_total=float(M)),
        out_shape=(jax.ShapeDtypeStruct((C, 1), jnp.float32),
                   jax.ShapeDtypeStruct((C, 1), jnp.float32)),
        grid=(n_tiles,),
        in_specs=[pl.BlockSpec((C, tm), lambda i: (0, i)),
                  pl.BlockSpec((C, 1), lambda i: (0, 0)),
                  pl.BlockSpec((C, 1), lambda i: (0, 0))],
        out_specs=(pl.BlockSpec((C, 1), lambda i: (0, 0)),
                   pl.BlockSpec((C, 1), lambda i: (0, 0))),
        scratch_shapes=[pltpu.VMEM((C, 1), jnp.float32),
                        pltpu.VMEM((C, 1), jnp.float32)],
        compiler_params=pltpu.CompilerParams(
            dimension_semantics=("arbitrary",), vmem_limit_bytes=_VMEM_LIMIT),
    )(x_cm, gamma2d, beta2d)

    out_cm = pl.pallas_call(
        _bn_apply_kernel,
        out_shape=jax.ShapeDtypeStruct((C, M), x.dtype),
        grid=(n_tiles,),
        in_specs=[pl.BlockSpec((C, tm), lambda i: (0, i)),
                  pl.BlockSpec((C, 1), lambda i: (0, 0)),
                  pl.BlockSpec((C, 1), lambda i: (0, 0))],
        out_specs=pl.BlockSpec((C, tm), lambda i: (0, i)),
        compiler_params=pltpu.CompilerParams(
            dimension_semantics=("parallel",), vmem_limit_bytes=_VMEM_LIMIT),
    )(x_cm, scale, shift)

    return out_cm.T.reshape(shape)


def batch_normalization(x, gamma, beta, *, eps=1e-5, max_tile_rows=None):
    """Training-mode BatchNorm on a channel-last input (..., C) — the D=4 NHWC case
    of the PyTorch module, but works for any channel-last rank."""
    shape = x.shape
    C = shape[-1]
    total = x.size
    M = total // C                                             # elements per channel

    layout = _flat_layout(total, C, jnp.dtype(x.dtype).itemsize, max_tile_rows)
    if layout is None:
        return _batch_normalization_transposed(x, gamma, beta, eps=eps)

    R, L, TR = layout
    n_tiles = R // TR

    # Free row-major view: channel of lane l is (l % C). No data movement.
    x_rl = x.reshape(R, L)
    reps = L // C
    gamma_lane = jnp.tile(gamma.astype(jnp.float32), reps).reshape(1, L)
    beta_lane = jnp.tile(beta.astype(jnp.float32), reps).reshape(1, L)

    kw = dict(c=C, l=L, eps=eps, m_total=float(M))

    if n_tiles == 1:
        # Whole array fits in one block: fused stats + apply, single HBM read of x.
        out_rl = pl.pallas_call(
            functools.partial(_bn_fused_kernel, **kw),
            out_shape=jax.ShapeDtypeStruct((R, L), x.dtype),
            grid=(1,),
            in_specs=[pl.BlockSpec((R, L), lambda i: (0, 0)),
                      pl.BlockSpec((1, L), lambda i: (0, 0)),
                      pl.BlockSpec((1, L), lambda i: (0, 0))],
            out_specs=pl.BlockSpec((R, L), lambda i: (0, 0)),
            compiler_params=pltpu.CompilerParams(
                dimension_semantics=("arbitrary",), vmem_limit_bytes=_VMEM_LIMIT),
        )(x_rl, gamma_lane, beta_lane)
        return out_rl.reshape(shape)

    # ---- Pass 1: per-channel statistics -> fused scale/shift (accumulator grid) ----
    scale, shift = pl.pallas_call(
        functools.partial(_bn_stats_kernel, **kw),
        out_shape=(jax.ShapeDtypeStruct((1, L), jnp.float32),
                   jax.ShapeDtypeStruct((1, L), jnp.float32)),
        grid=(n_tiles,),
        in_specs=[pl.BlockSpec((TR, L), lambda i: (i, 0)),
                  pl.BlockSpec((1, L), lambda i: (0, 0)),
                  pl.BlockSpec((1, L), lambda i: (0, 0))],
        out_specs=(pl.BlockSpec((1, L), lambda i: (0, 0)),
                   pl.BlockSpec((1, L), lambda i: (0, 0))),
        scratch_shapes=[pltpu.VMEM((1, L), jnp.float32),
                        pltpu.VMEM((1, L), jnp.float32)],
        compiler_params=pltpu.CompilerParams(
            dimension_semantics=("arbitrary",), vmem_limit_bytes=_VMEM_LIMIT),
    )(x_rl, gamma_lane, beta_lane)

    # ---- Pass 2: normalize (independent tiles -> parallel across TensorCores) ----
    out_rl = pl.pallas_call(
        _bn_apply_kernel,
        out_shape=jax.ShapeDtypeStruct((R, L), x.dtype),
        grid=(n_tiles,),
        in_specs=[pl.BlockSpec((TR, L), lambda i: (i, 0)),
                  pl.BlockSpec((1, L), lambda i: (0, 0)),
                  pl.BlockSpec((1, L), lambda i: (0, 0))],
        out_specs=pl.BlockSpec((TR, L), lambda i: (i, 0)),
        compiler_params=pltpu.CompilerParams(
            dimension_semantics=("parallel",), vmem_limit_bytes=_VMEM_LIMIT),
    )(x_rl, scale, shift)

    return out_rl.reshape(shape)


# --------------------------------------------------------------------------
# Reference + self-test
# --------------------------------------------------------------------------

def _reference_batchnorm(x_nhwc, gamma, beta, eps=1e-5):
    # Pure-JAX reference: NHWC -> NCHW BatchNorm2d (training, batch stats) -> NHWC.
    x = jnp.transpose(x_nhwc, (0, 3, 1, 2)).astype(jnp.float32)   # NCHW
    mean = jnp.mean(x, axis=(0, 2, 3), keepdims=True)
    var = jnp.mean((x - mean) ** 2, axis=(0, 2, 3), keepdims=True)
    y = (x - mean) / jnp.sqrt(var + eps)
    y = y * gamma.reshape(1, -1, 1, 1) + beta.reshape(1, -1, 1, 1)
    return jnp.transpose(y, (0, 2, 3, 1)).astype(x_nhwc.dtype)    # back to NHWC


if __name__ == "__main__":
    key = jax.random.PRNGKey(0)
    N, H, W, C = 2, 16, 16, 4          # channel-last input (D=4 case)
    x = jax.random.normal(key, (N, H, W, C), dtype=jnp.float32)

    # nn.BatchNorm2d default parameter init (fresh module => training mode).
    gamma = jnp.ones((C,), dtype=jnp.float32)
    beta = jnp.zeros((C,), dtype=jnp.float32)

    ref = _reference_batchnorm(x, gamma, beta)

    # Multi-tile path: (8,128) row tiles, grid of 2 -> exercises streaming stats
    # accumulation and the parallel apply pass.
    out_tiled = jax.block_until_ready(
        batch_normalization(x, gamma, beta, max_tile_rows=8))
    assert out_tiled.shape == (N, H, W, C)
    assert jnp.allclose(out_tiled, ref, atol=1e-4, rtol=1e-4), "tiled mismatch vs reference"

    # Default path: whole array in one block -> fused single-pass kernel.
    out = jax.block_until_ready(batch_normalization(x, gamma, beta))
    assert out.shape == (N, H, W, C)
    assert jnp.allclose(out, ref, atol=1e-4, rtol=1e-4), "fused mismatch vs reference"

    print("KERNEL_OK")
</pallas_src>

<mosaic_0001>
module attributes {stable_mosaic.version = 11 : i64} {
  func.func @_bn_stats_kernel(%arg0: i32, %arg1: memref<8x128xf32, #tpu.memory_space<vmem>>, %arg2: memref<1x128xf32, #tpu.memory_space<vmem>>, %arg3: memref<1x128xf32, #tpu.memory_space<vmem>>, %arg4: memref<1x128xf32, #tpu.memory_space<vmem>>, %arg5: memref<1x128xf32, #tpu.memory_space<vmem>>, %arg6: memref<1x128xf32, #tpu.memory_space<vmem>>, %arg7: memref<1x128xf32, #tpu.memory_space<vmem>>) attributes {dimension_semantics = [#tpu.dimension_semantics<arbitrary>], iteration_bounds = array<i64: 2>, scalar_prefetch = 0 : i64, scratch_operands = 2 : i64, tpu.core_type = #tpu.core_type<tc>, window_params = [{transform_indices = @transform_0, window_bounds = array<i64: 8, 128>}, {pipeline_mode = #tpu.pipeline_mode<synchronous>, transform_indices = @transform_1, window_bounds = array<i64: 1, 128>}, {pipeline_mode = #tpu.pipeline_mode<synchronous>, transform_indices = @transform_2, window_bounds = array<i64: 1, 128>}, {pipeline_mode = #tpu.pipeline_mode<synchronous>, transform_indices = @transform_3, window_bounds = array<i64: 1, 128>}, {pipeline_mode = #tpu.pipeline_mode<synchronous>, transform_indices = @transform_4, window_bounds = array<i64: 1, 128>}]} {
    %c0_i32 = arith.constant 0 : i32
    %0 = arith.cmpi eq, %arg0, %c0_i32 : i32
    %1 = arith.extui %0 : i1 to i32
    %c0_i32_0 = arith.constant 0 : i32
    %2 = arith.cmpi ne, %1, %c0_i32_0 : i32
    scf.if %2 {
      %cst_12 = arith.constant 0.000000e+00 : f32
      %18 = vector.broadcast %cst_12 : f32 to vector<1x128xf32>
      %c0_13 = arith.constant 0 : index
      %c0_14 = arith.constant 0 : index
      %19 = vector.load %arg6[%c0_13, %c0_14] : memref<1x128xf32, #tpu.memory_space<vmem>>, vector<1x128xf32>
      tpu.vector_store %arg6[%c0_13, %c0_14], %18 {strides = array<i32>} : memref<1x128xf32, #tpu.memory_space<vmem>>, vector<1x128xf32>,
      %cst_15 = arith.constant 0.000000e+00 : f32
      %20 = vector.broadcast %cst_15 : f32 to vector<1x128xf32>
      %c0_16 = arith.constant 0 : index
      %c0_17 = arith.constant 0 : index
      %21 = vector.load %arg7[%c0_16, %c0_17] : memref<1x128xf32, #tpu.memory_space<vmem>>, vector<1x128xf32>
      tpu.vector_store %arg7[%c0_16, %c0_17], %20 {strides = array<i32>} : memref<1x128xf32, #tpu.memory_space<vmem>>, vector<1x128xf32>,
    } else {
    }
    %c0 = arith.constant 0 : index
    %c0_1 = arith.constant 0 : index
    %3 = vector.load %arg1[%c0, %c0_1] : memref<8x128xf32, #tpu.memory_space<vmem>>, vector<8x128xf32>
    %c0_2 = arith.constant 0 : index
    %c0_3 = arith.constant 0 : index
    %4 = vector.load %arg6[%c0_2, %c0_3] : memref<1x128xf32, #tpu.memory_space<vmem>>, vector<1x128xf32>
    %cst = arith.constant dense<0.000000e+00> : vector<128xf32>
    %5 = vector.multi_reduction <add>, %3, %cst [0] : vector<8x128xf32> to vector<128xf32>
    %6 = vector.shape_cast %5 : vector<128xf32> to vector<1x128xf32>
    %7 = arith.addf %4, %6 : vector<1x128xf32>
    %c0_4 = arith.constant 0 : index
    %c0_5 = arith.constant 0 : index
    %8 = vector.load %arg6[%c0_4, %c0_5] : memref<1x128xf32, #tpu.memory_space<vmem>>, vector<1x128xf32>
    tpu.vector_store %arg6[%c0_4, %c0_5], %7 {strides = array<i32>} : memref<1x128xf32, #tpu.memory_space<vmem>>, vector<1x128xf32>,
    %c0_6 = arith.constant 0 : index
    %c0_7 = arith.constant 0 : index
    %9 = vector.load %arg7[%c0_6, %c0_7] : memref<1x128xf32, #tpu.memory_space<vmem>>, vector<1x128xf32>
    %10 = arith.mulf %3, %3 : vector<8x128xf32>
    %cst_8 = arith.constant dense<0.000000e+00> : vector<128xf32>
    %11 = vector.multi_reduction <add>, %10, %cst_8 [0] : vector<8x128xf32> to vector<128xf32>
    %12 = vector.shape_cast %11 : vector<128xf32> to vector<1x128xf32>
    %13 = arith.addf %9, %12 : vector<1x128xf32>
    %c0_9 = arith.constant 0 : index
    %c0_10 = arith.constant 0 : index
    %14 = vector.load %arg7[%c0_9, %c0_10] : memref<1x128xf32, #tpu.memory_space<vmem>>, vector<1x128xf32>
    tpu.vector_store %arg7[%c0_9, %c0_10], %13 {strides = array<i32>} : memref<1x128xf32, #tpu.memory_space<vmem>>, vector<1x128xf32>,
    %c1_i32 = arith.constant 1 : i32
    %15 = arith.cmpi eq, %arg0, %c1_i32 : i32
    %16 = arith.extui %15 : i1 to i32
    %c0_i32_11 = arith.constant 0 : i32
    %17 = arith.cmpi ne, %16, %c0_i32_11 : i32
    scf.if %17 {
      %c0_12 = arith.constant 0 : index
      %c0_13 = arith.constant 0 : index
      %18 = vector.load %arg6[%c0_12, %c0_13] : memref<1x128xf32, #tpu.memory_space<vmem>>, vector<1x128xf32>
      %c0_14 = arith.constant 0 : index
      %c0_15 = arith.constant 0 : index
      %19 = vector.load %arg7[%c0_14, %c0_15] : memref<1x128xf32, #tpu.memory_space<vmem>>, vector<1x128xf32>
      %c0_16 = arith.constant 0 : index
      %c0_17 = arith.constant 0 : index
      %20 = vector.load %arg2[%c0_16, %c0_17] : memref<1x128xf32, #tpu.memory_space<vmem>>, vector<1x128xf32>
      %c0_18 = arith.constant 0 : index
      %c0_19 = arith.constant 0 : index
      %21 = vector.load %arg3[%c0_18, %c0_19] : memref<1x128xf32, #tpu.memory_space<vmem>>, vector<1x128xf32>
      %c4_i32 = arith.constant 4 : i32
      %22 = tpu.dynamic_rotate %18 by %c4_i32 dim 1 : vector<1x128xf32>, i32 -> vector<1x128xf32>
      %23 = arith.addf %18, %22 : vector<1x128xf32>
      %c8_i32 = arith.constant 8 : i32
      %24 = tpu.dynamic_rotate %23 by %c8_i32 dim 1 : vector<1x128xf32>, i32 -> vector<1x128xf32>
      %25 = arith.addf %23, %24 : vector<1x128xf32>
      %c16_i32 = arith.constant 16 : i32
      %26 = tpu.dynamic_rotate %25 by %c16_i32 dim 1 : vector<1x128xf32>, i32 -> vector<1x128xf32>
      %27 = arith.addf %25, %26 : vector<1x128xf32>
      %c32_i32 = arith.constant 32 : i32
      %28 = tpu.dynamic_rotate %27 by %c32_i32 dim 1 : vector<1x128xf32>, i32 -> vector<1x128xf32>
      %29 = arith.addf %27, %28 : vector<1x128xf32>
      %c64_i32 = arith.constant 64 : i32
      %30 = tpu.dynamic_rotate %29 by %c64_i32 dim 1 : vector<1x128xf32>, i32 -> vector<1x128xf32>
      %31 = arith.addf %29, %30 : vector<1x128xf32>
      %c4_i32_20 = arith.constant 4 : i32
      %32 = tpu.dynamic_rotate %19 by %c4_i32_20 dim 1 : vector<1x128xf32>, i32 -> vector<1x128xf32>
      %33 = arith.addf %19, %32 : vector<1x128xf32>
      %c8_i32_21 = arith.constant 8 : i32
      %34 = tpu.dynamic_rotate %33 by %c8_i32_21 dim 1 : vector<1x128xf32>, i32 -> vector<1x128xf32>
      %35 = arith.addf %33, %34 : vector<1x128xf32>
      %c16_i32_22 = arith.constant 16 : i32
      %36 = tpu.dynamic_rotate %35 by %c16_i32_22 dim 1 : vector<1x128xf32>, i32 -> vector<1x128xf32>
      %37 = arith.addf %35, %36 : vector<1x128xf32>
      %c32_i32_23 = arith.constant 32 : i32
      %38 = tpu.dynamic_rotate %37 by %c32_i32_23 dim 1 : vector<1x128xf32>, i32 -> vector<1x128xf32>
      %39 = arith.addf %37, %38 : vector<1x128xf32>
      %c64_i32_24 = arith.constant 64 : i32
      %40 = tpu.dynamic_rotate %39 by %c64_i32_24 dim 1 : vector<1x128xf32>, i32 -> vector<1x128xf32>
      %41 = arith.addf %39, %40 : vector<1x128xf32>
      %cst_25 = arith.constant 0.001953125 : f32
      %42 = vector.broadcast %cst_25 : f32 to vector<1x128xf32>
      %43 = arith.mulf %31, %42 : vector<1x128xf32>
      %cst_26 = arith.constant 0.001953125 : f32
      %44 = vector.broadcast %cst_26 : f32 to vector<1x128xf32>
      %45 = arith.mulf %41, %44 : vector<1x128xf32>
      %46 = arith.mulf %43, %43 : vector<1x128xf32>
      %47 = arith.subf %45, %46 : vector<1x128xf32>
      %cst_27 = arith.constant 9.99999974E-6 : f32
      %48 = vector.broadcast %cst_27 : f32 to vector<1x128xf32>
      %49 = arith.addf %47, %48 : vector<1x128xf32>
      %50 = math.rsqrt %49 : vector<1x128xf32>
      %51 = arith.mulf %20, %50 : vector<1x128xf32>
      %52 = arith.mulf %43, %51 : vector<1x128xf32>
      %53 = arith.subf %21, %52 : vector<1x128xf32>
      %c0_28 = arith.constant 0 : index
      %c0_29 = arith.constant 0 : index
      %54 = vector.load %arg4[%c0_28, %c0_29] : memref<1x128xf32, #tpu.memory_space<vmem>>, vector<1x128xf32>
      tpu.vector_store %arg4[%c0_28, %c0_29], %51 {strides = array<i32>} : memref<1x128xf32, #tpu.memory_space<vmem>>, vector<1x128xf32>,
      %c0_30 = arith.constant 0 : index
      %c0_31 = arith.constant 0 : index
      %55 = vector.load %arg5[%c0_30, %c0_31] : memref<1x128xf32, #tpu.memory_space<vmem>>, vector<1x128xf32>
      tpu.vector_store %arg5[%c0_30, %c0_31], %53 {strides = array<i32>} : memref<1x128xf32, #tpu.memory_space<vmem>>, vector<1x128xf32>,
    } else {
    }
    return
  }
  func.func @transform_0(%arg0: i32) -> (i32, i32) {
    %c0_i32 = arith.constant 0 : i32
    %c0_i32_0 = arith.constant 0 : i32
    return %arg0, %c0_i32 : i32, i32
  }
  func.func @transform_1(%arg0: i32) -> (i32, i32) {
    %c0_i32 = arith.constant 0 : i32
    %c0_i32_0 = arith.constant 0 : i32
    %c0_i32_1 = arith.constant 0 : i32
    return %c0_i32, %c0_i32_0 : i32, i32
  }
  func.func @transform_2(%arg0: i32) -> (i32, i32) {
    %c0_i32 = arith.constant 0 : i32
    %c0_i32_0 = arith.constant 0 : i32
    %c0_i32_1 = arith.constant 0 : i32
    return %c0_i32, %c0_i32_0 : i32, i32
  }
  func.func @transform_3(%arg0: i32) -> (i32, i32) {
    %c0_i32 = arith.constant 0 : i32
    %c0_i32_0 = arith.constant 0 : i32
    %c0_i32_1 = arith.constant 0 : i32
    return %c0_i32, %c0_i32_0 : i32, i32
  }
  func.func @transform_4(%arg0: i32) -> (i32, i32) {
    %c0_i32 = arith.constant 0 : i32
    %c0_i32_0 = arith.constant 0 : i32
    %c0_i32_1 = arith.constant 0 : i32
    return %c0_i32, %c0_i32_0 : i32, i32
  }
}

</mosaic_0001>

<llo_original>
// kernel: tpu_custom_call.1
$region0: #{tpu_custom_call.1}
  #allocation0 [shape = 'u32[]', space=smem, size = 0x4, offset = 0x4, fixed_abs, tag = 'smem constant byte address 0x4 - core index']
  #allocation1 [shape = 'u32[144,128]{1,0:T(1,128)}', space=vmem, size = 0x12000, scoped, tag = 'internal scratch']
  #allocation2 [shape = 'f32[1,128]{1,0:T(1,128)}', space=vmem, size = 0x200, scoped, tag = 'scratch operand']
  #allocation3 [shape = 'f32[1,128]{1,0:T(1,128)}', space=vmem, size = 0x200, scoped, tag = 'scratch operand']
  %s0 = inlined_call_operand.hbm [shape: f32[16,128], index: 0, kind: input, shape index: {}]
  %s1 = inlined_call_operand.vmem [shape: f32[1,128], index: 1, kind: input, shape index: {}]
  %s2 = inlined_call_operand.vmem [shape: f32[1,128], index: 2, kind: input, shape index: {}]
  %s3 = inlined_call_operand.hbm [shape: f32[1,128], index: 3, kind: output, shape index: {0}]
  %s4 = inlined_call_operand.hbm [shape: f32[1,128], index: 4, kind: output, shape index: {1}]
  %5 = xla_tuple %s3, %s4
  %s6 = sld [smem:[#allocation0]]
  $region65: #{tpu_custom_call.1} parent=0
    _
  %s8 = ssub.s32 1, %s6
  %s9 = scalar_select 0, %s8, %s6
  $region1: #{tpu_custom_call.1} parent=0
    #allocation4 [shape = 'u8[8192]{0}', space=vmem, size = 0x2000, scoped, tag = 'input window, operand 0']
    #allocation5 [shape = 's32[2]{0}', space=sflag, size = 0x8, scoped, tag = 'scoped memory for tpu_custom_call.1']
    #allocation6 [shape = 's32[2]{0}', space=sflag, size = 0x8, scoped, tag = 'scoped memory for tpu_custom_call.1']
    #allocation7 [shape = 'u8[512]{0}', space=vmem, size = 0x400, scoped, tag = 'output window, operand 0, single buffered']
    #allocation8 [shape = 'u8[512]{0}', space=vmem, size = 0x400, scoped, tag = 'output window, operand 1, single buffered']
    #allocation9 [shape = 's32[1]{0}', space=sflag, size = 0x4, scoped, tag = 'scoped memory for tpu_custom_call.1']
    %10 = vsyncpa [#allocation5], 0
    %s11 = scalar_lea.sflag [#allocation5], 1
    %12 = vsyncpa %s11, 0
    %13 = vsyncpa [#allocation6], 0
    %14 = vsyncpa [#allocation9], 0
    loop: start=0, step=1, limit=4
    $region2: #{tpu_custom_call.1} parent=1 // loop_pre_header
      _
    $region3: #{tpu_custom_call.1} parent=1 // loop_header
      %s16 = sphi 0, %s20
      %p17 = scmp.ge.s32.totalorder %s16, 4
      %s26 = sphi 0, %s28
      %s29 = sphi 0, %s26
      %s30 = sphi 0, %s29
      %s46 = sphi 0, %s30
      %s50 = sphi 0, %s50
      %s52 = sphi 0, %s50
      %s53 = sphi 0, %s52
      %s67 = sphi 0, %s53
      %s71 = sphi 0, %s71
      %s73 = sphi 0, %s71
      %s74 = sphi 0, %s73
      %s88 = sphi 0, %s74
      %s92 = sphi 0, %s92
      %s94 = sphi 0, %s92
      %s95 = sphi 0, %s94
      %s109 = sphi 0, %s95
      %s113 = sphi 0, %s113
      %s115 = sphi 0, %s113
      %s116 = sphi 0, %s115
      %s130 = sphi 0, %s116
    $region4: #{tpu_custom_call.1} parent=1 // loop_header_branch
      %19 = sbr.rel (%p17) target = $region8
    $region5: #{tpu_custom_call.1} parent=1 // loop_body
      %s21 = ssub.s32 %s16, 1
      %s22 = ssub.s32 %s16, 2
      %s23 = sadd.s32 %s16, 1
      %s24 = ssub.s32 %s16, %s23
      %p25 = scmp.eq.s32.totalorder %s24, 0
      %s27 = sadd.s32 %s26, 1
      %s28 = scalar_select %p25, %s26, %s27
      %p31 = pneg %p25
      %p32 = scmp.eq.s32.totalorder %s16, 1
      %p33 = por %p31, %p32
      %p34 = scmp.ne.s32.totalorder %s26, %s29
      %p35 = scmp.eq.s32.totalorder %s16, 0
      %p36 = por %p34, %p35
      %p37 = scmp.ne.s32.totalorder %s26, %s29
      %p38 = scmp.eq.s32.totalorder %s21, 1
      %p39 = por %p37, %p38
      %p40 = scmp.ne.s32.totalorder %s29, %s30
      %p41 = scmp.eq.s32.totalorder %s21, 0
      %p42 = por %p40, %p41
      %p43 = scmp.ne.s32.totalorder %s29, %s30
      %p44 = scmp.eq.s32.totalorder %s22, 1
      %p45 = por %p43, %p44
      %p47 = scmp.ne.s32.totalorder %s30, %s46
      %p48 = scmp.eq.s32.totalorder %s22, 0
      %p49 = por %p47, %p48
      %s51 = sadd.s32 %s50, 1
      %p54 = scmp.eq.s32.totalorder %s16, 1
      %p55 = scmp.ne.s32.totalorder %s50, %s52
      %p56 = scmp.eq.s32.totalorder %s16, 0
      %p57 = por %p55, %p56
      %p58 = scmp.ne.s32.totalorder %s50, %s52
      %p59 = scmp.eq.s32.totalorder %s21, 1
      %p60 = por %p58, %p59
      %p61 = scmp.ne.s32.totalorder %s52, %s53
      %p62 = scmp.eq.s32.totalorder %s21, 0
      %p63 = por %p61, %p62
      %p64 = scmp.ne.s32.totalorder %s52, %s53
      %p65 = scmp.eq.s32.totalorder %s22, 1
      %p66 = por %p64, %p65
      %p68 = scmp.ne.s32.totalorder %s53, %s67
      %p69 = scmp.eq.s32.totalorder %s22, 0
      %p70 = por %p68, %p69
      %s72 = sadd.s32 %s71, 1
      %p75 = scmp.eq.s32.totalorder %s16, 1
      %p76 = scmp.ne.s32.totalorder %s71, %s73
      %p77 = scmp.eq.s32.totalorder %s16, 0
      %p78 = por %p76, %p77
      %p79 = scmp.ne.s32.totalorder %s71, %s73
      %p80 = scmp.eq.s32.totalorder %s21, 1
      %p81 = por %p79, %p80
      %p82 = scmp.ne.s32.totalorder %s73, %s74
      %p83 = scmp.eq.s32.totalorder %s21, 0
      %p84 = por %p82, %p83
      %p85 = scmp.ne.s32.totalorder %s73, %s74
      %p86 = scmp.eq.s32.totalorder %s22, 1
      %p87 = por %p85, %p86
      %p89 = scmp.ne.s32.totalorder %s74, %s88
      %p90 = scmp.eq.s32.totalorder %s22, 0
      %p91 = por %p89, %p90
      %s93 = sadd.s32 %s92, 1
      %p96 = scmp.eq.s32.totalorder %s16, 1
      %p97 = scmp.ne.s32.totalorder %s92, %s94
      %p98 = scmp.eq.s32.totalorder %s16, 0
      %p99 = por %p97, %p98
      %p100 = scmp.ne.s32.totalorder %s92, %s94
      %p101 = scmp.eq.s32.totalorder %s21, 1
      %p102 = por %p100, %p101
      %p103 = scmp.ne.s32.totalorder %s94, %s95
      %p104 = scmp.eq.s32.totalorder %s21, 0
      %p105 = por %p103, %p104
      %p106 = scmp.ne.s32.totalorder %s94, %s95
      %p107 = scmp.eq.s32.totalorder %s22, 1
      %p108 = por %p106, %p107
      %p110 = scmp.ne.s32.totalorder %s95, %s109
      %p111 = scmp.eq.s32.totalorder %s22, 0
      %p112 = por %p110, %p111
      %s114 = sadd.s32 %s113, 1
      %p117 = scmp.eq.s32.totalorder %s16, 1
      %p118 = scmp.ne.s32.totalorder %s113, %s115
      %p119 = scmp.eq.s32.totalorder %s16, 0
      %p120 = por %p118, %p119
      %p121 = scmp.ne.s32.totalorder %s113, %s115
      %p122 = scmp.eq.s32.totalorder %s21, 1
      %p123 = por %p121, %p122
      %p124 = scmp.ne.s32.totalorder %s115, %s116
      %p125 = scmp.eq.s32.totalorder %s21, 0
      %p126 = por %p124, %p125
      %p127 = scmp.ne.s32.totalorder %s115, %s116
      %p128 = scmp.eq.s32.totalorder %s22, 1
      %p129 = por %p127, %p128
      %p131 = scmp.ne.s32.totalorder %s116, %s130
      %p132 = scmp.eq.s32.totalorder %s22, 0
      %p133 = por %p131, %p132
      %p134 = scmp.le.s32.totalorder 1, %s16
      %p135 = scmp.lt.s32.totalorder %s16, 3
      %p136 = pnand %p134, %p135
      %p137 = pneg %p136
      // Predicated region
      $region9: #{tpu_custom_call.1} parent=5 // pred_check
        _
      $region10: #{tpu_custom_call.1} parent=5 // pred_check_branch
        %139 = sbr.rel (%p136) target = $region12
      $region11: #{tpu_custom_call.1} parent=5 // pred_region
        %s140 = ssub.s32 %s16, 1
        // Predicated region
        $region13: #{tpu_custom_call.1} parent=11 // pred_check
          %p141 = pneg %p63
        $region14: #{tpu_custom_call.1} parent=11 // pred_check_branch
          %143 = sbr.rel (%p141) target = $region16
        $region15: #{tpu_custom_call.1} parent=11 // pred_region
          _
        $region16: #{tpu_custom_call.1} parent=11 // pred_fallthru
          _
        // Predicated region
        $region17: #{tpu_custom_call.1} parent=11 // pred_check
          %p144 = pneg %p84
        $region18: #{tpu_custom_call.1} parent=11 // pred_check_branch
          %146 = sbr.rel (%p144) target = $region20
        $region19: #{tpu_custom_call.1} parent=11 // pred_region
          _
        $region20: #{tpu_custom_call.1} parent=11 // pred_fallthru
          _
      $region12: #{tpu_custom_call.1} parent=5 // pred_fallthru
        _
      %p147 = scmp.lt.s32.totalorder %s16, 2
      // Predicated region
      $region21: #{tpu_custom_call.1} parent=5 // pred_check
        %p148 = pneg %p147
      $region22: #{tpu_custom_call.1} parent=5 // pred_check_branch
        %150 = sbr.rel (%p148) target = $region24
      $region23: #{tpu_custom_call.1} parent=5 // pred_region
        // Predicated region
        $region25: #{tpu_custom_call.1} parent=23 // pred_check
          %p151 = pneg %p36
        $region26: #{tpu_custom_call.1} parent=23 // pred_check_branch
          %153 = sbr.rel (%p151) target = $region28
        $region27: #{tpu_custom_call.1} parent=23 // pred_region
          %s154 = sand.u32 %s26, 1
          %s155 = scalar_lea.sflag [#allocation5], %s154
          %s156 = sand.u32 %s26, 1
          %s157 = smul.addr %s156, 8
          %s158 = scalar_lea.vmem [#allocation4], %s157
          %s160 = ssub.s32 128, 128
          %161 = vsyncadd %s155, %s160
          %s162 = smul.addr %s16, 128
          %s163 = scalar_lea.hbm %s0, %s162
          %s165 = sshll.u32 %s158, 4
          %s166 = int_to_ptr.vmem [resolvable:$true] %s165
          %168 = dma.hbm_to_vmem [thread:$0]  %s163, 128, %s166, %s155
        $region28: #{tpu_custom_call.1} parent=23 // pred_fallthru
          _
      $region24: #{tpu_custom_call.1} parent=5 // pred_fallthru
        _
      %p169 = scmp.le.s32.totalorder 1, %s16
      %p170 = scmp.lt.s32.totalorder %s16, 3
      %p171 = pnand %p169, %p170
      %p172 = pneg %p171
      // Predicated region
      $region29: #{tpu_custom_call.1} parent=5 // pred_check
        _
      $region30: #{tpu_custom_call.1} parent=5 // pred_check_branch
        %174 = sbr.rel (%p171) target = $region32
      $region31: #{tpu_custom_call.1} parent=5 // pred_region
        %s175 = ssub.s32 %s16, 1
        %s176 = sand.u32 %s29, 1
        %s177 = scalar_lea.sflag [#allocation5], %s176
        %s178 = sand.u32 %s29, 1
        %s179 = smul.addr %s178, 8
        %s180 = scalar_lea.vmem [#allocation4], %s179
        // Predicated region
        $region33: #{tpu_custom_call.1} parent=31 // pred_check
          %p181 = pneg %p42
        $region34: #{tpu_custom_call.1} parent=31 // pred_check_branch
          %183 = sbr.rel (%p181) target = $region36
        $region35: #{tpu_custom_call.1} parent=31 // pred_region
          %184 = dma.done %s177, 128
        $region36: #{tpu_custom_call.1} parent=31 // pred_fallthru
          _
        %s185 = sand.u32 %s29, 1
        %s186 = scalar_lea.sflag [#allocation5], %s185
        %s187 = sand.u32 %s29, 1
        %s188 = smul.addr %s187, 8
        %s189 = scalar_lea.vmem [#allocation4], %s188
        %p190 = pneg %p42
        %p191 = pneg %p39
        %p192 = pneg %p63
        %p193 = pneg %p60
        %p194 = pneg %p84
        %p195 = pneg %p81
        %p196 = pneg %p105
        %p197 = pneg %p102
        %p198 = pneg %p126
        %p199 = pneg %p123
        %p200 = scmp.eq.s32.totalorder %s21, 0
        // Predicated region
        $region37: #{tpu_custom_call.1} parent=31 // pred_check
          %p201 = pneg %p200
        $region38: #{tpu_custom_call.1} parent=31 // pred_check_branch
          %203 = sbr.rel (%p201) target = $region40
        $region39: #{tpu_custom_call.1} parent=31 // pred_region
          %204 = vst [vmem:[#allocation2] sm:$0x1] 0.0
          %205 = vst [vmem:[#allocation3] sm:$0x1] 0.0
        $region40: #{tpu_custom_call.1} parent=31 // pred_fallthru
          _
        %v206 = vld [vmem:[%s180] sm:$0xff]
        %v207 = vld [vmem:[#allocation2] sm:$0x1]
        %v208 = vrot.slane %v206, 4
        %v209 = vadd.f32 %v206, %v208
        %v210 = vrot.slane %v209, 2
        %v211 = vadd.f32 %v209, %v210
        %v212 = vrot.slane %v211, 1
        %v213 = vadd.f32 %v211, %v212
        %v214 = vadd.f32 %v207, %v213
        %215 = vst [vmem:[#allocation2] sm:$0x1] %v214
        %v216 = vld [vmem:[#allocation3] sm:$0x1]
        %v217 = vmul.f32 %v206, %v206
        %v218 = vrot.slane %v217, 4
        %v219 = vadd.f32 %v217, %v218
        %v220 = vrot.slane %v219, 2
        %v221 = vadd.f32 %v219, %v220
        %v222 = vrot.slane %v221, 1
        %v223 = vadd.f32 %v221, %v222
        %v224 = vadd.f32 %v216, %v223
        %225 = vst [vmem:[#allocation3] sm:$0x1] %v224
        %p226 = scmp.eq.s32.totalorder %s21, 1
        // Predicated region
        $region41: #{tpu_custom_call.1} parent=31 // pred_check
          %p227 = pneg %p226
        $region42: #{tpu_custom_call.1} parent=31 // pred_check_branch
          %229 = sbr.rel (%p227) target = $region44
        $region43: #{tpu_custom_call.1} parent=31 // pred_region
          %v230 = vld [vmem:[#allocation2] sm:$0x1]
          %v231 = vld [vmem:[#allocation3] sm:$0x1]
          %v232 = vld [vmem:[%s1] sm:$0x1]
          %v233 = vld [vmem:[%s2] sm:$0x1]
          %234 = vrot.lane.b32.xlu0 %v230, 4
          %v235 = vpop.permute.xlu0 %234
          %v236 = vadd.f32 %v230, %v235
          %237 = vrot.lane.b32.xlu0 %v236, 8
          %v238 = vpop.permute.xlu0 %237
          %v239 = vadd.f32 %v236, %v238
          %240 = vrot.lane.b32.xlu0 %v239, 16
          %v241 = vpop.permute.xlu0 %240
          %v242 = vadd.f32 %v239, %v241
          %243 = vrot.lane.b32.xlu0 %v242, 32
          %v244 = vpop.permute.xlu0 %243
          %v245 = vadd.f32 %v242, %v244
          %246 = vrot.lane.b32.xlu0 %v245, 64
          %v247 = vpop.permute.xlu0 %246
          %v248 = vadd.f32 %v245, %v247
          %249 = vrot.lane.b32.xlu0 %v231, 4
          %v250 = vpop.permute.xlu0 %249
          %v251 = vadd.f32 %v231, %v250
          %252 = vrot.lane.b32.xlu0 %v251, 8
          %v253 = vpop.permute.xlu0 %252
          %v254 = vadd.f32 %v251, %v253
          %255 = vrot.lane.b32.xlu0 %v254, 16
          %v256 = vpop.permute.xlu0 %255
          %v257 = vadd.f32 %v254, %v256
          %258 = vrot.lane.b32.xlu0 %v257, 32
          %v259 = vpop.permute.xlu0 %258
          %v260 = vadd.f32 %v257, %v259
          %261 = vrot.lane.b32.xlu0 %v260, 64
          %v262 = vpop.permute.xlu0 %261
          %v263 = vadd.f32 %v260, %v262
          %v264 = vmul.f32 %v248, 0.001953125
          %v265 = vmul.f32 %v263, 0.001953125
          %v266 = vmul.f32 %v264, %v264
          %v267 = vsub.f32 %v265, %v266
          %v268 = vadd.f32 %v267, 1e-05
          %v269 = vrsqrt.pop %v268
          %v270 = vmul.f32 %v232, %v269
          %v271 = vmul.f32 %v264, %v270
          %v272 = vsub.f32 %v233, %v271
          %273 = vst [vmem:[#allocation7] sm:$0x1] %v270
          %274 = vst [vmem:[#allocation8] sm:$0x1] %v272
        $region44: #{tpu_custom_call.1} parent=31 // pred_fallthru
          _
        // Predicated region
        $region45: #{tpu_custom_call.1} parent=31 // pred_check
          %p275 = pneg %p102
        $region46: #{tpu_custom_call.1} parent=31 // pred_check_branch
          %277 = sbr.rel (%p275) target = $region48
        $region47: #{tpu_custom_call.1} parent=31 // pred_region
          %s279 = ssub.s32 16, 16
          %280 = vsyncadd [#allocation6], %s279
          %s282 = sshll.u32 [#allocation7], 4
          %s283 = int_to_ptr.vmem [resolvable:$true] %s282
          %285 = dma.vmem_to_hbm [thread:$0]  %s283, 16, %s3, [#allocation6]
        $region48: #{tpu_custom_call.1} parent=31 // pred_fallthru
          _
        // Predicated region
        $region49: #{tpu_custom_call.1} parent=31 // pred_check
          %p286 = pneg %p123
        $region50: #{tpu_custom_call.1} parent=31 // pred_check_branch
          %288 = sbr.rel (%p286) target = $region52
        $region51: #{tpu_custom_call.1} parent=31 // pred_region
          %s290 = ssub.s32 16, 16
          %291 = vsyncadd [#allocation9], %s290
          %s293 = sshll.u32 [#allocation8], 4
          %s294 = int_to_ptr.vmem [resolvable:$true] %s293
          %296 = dma.vmem_to_hbm [thread:$0]  %s294, 16, %s4, [#allocation9]
        $region52: #{tpu_custom_call.1} parent=31 // pred_fallthru
          _
        // Predicated region
        $region53: #{tpu_custom_call.1} parent=31 // pred_check
          %p297 = pneg %p102
        $region54: #{tpu_custom_call.1} parent=31 // pred_check_branch
          %299 = sbr.rel (%p297) target = $region56
        $region55: #{tpu_custom_call.1} parent=31 // pred_region
          %300 = dma.done [#allocation6], 16
        $region56: #{tpu_custom_call.1} parent=31 // pred_fallthru
          _
        // Predicated region
        $region57: #{tpu_custom_call.1} parent=31 // pred_check
          %p301 = pneg %p123
        $region58: #{tpu_custom_call.1} parent=31 // pred_check_branch
          %303 = sbr.rel (%p301) target = $region60
        $region59: #{tpu_custom_call.1} parent=31 // pred_region
          %304 = dma.done [#allocation9], 16
        $region60: #{tpu_custom_call.1} parent=31 // pred_fallthru
          _
      $region32: #{tpu_custom_call.1} parent=5 // pred_fallthru
        _
      %p305 = scmp.le.s32.totalorder 2, %s16
      // Predicated region
      $region61: #{tpu_custom_call.1} parent=5 // pred_check
        %p306 = pneg %p305
      $region62: #{tpu_custom_call.1} parent=5 // pred_check_branch
        %308 = sbr.rel (%p306) target = $region64
      $region63: #{tpu_custom_call.1} parent=5 // pred_region
        %s309 = ssub.s32 %s16, 2
      $region64: #{tpu_custom_call.1} parent=5 // pred_fallthru
        _
    $region6: #{tpu_custom_call.1} parent=1 // loop_footer
      %s20 = sadd.s32 1, %s16
    $region7: #{tpu_custom_call.1} parent=1 // loop_footer_branch
      %15 = sbr.rel target = $region3
    $region8: #{tpu_custom_call.1} parent=1 // loop_exit
      _
    %310 = vsyncpa [#allocation5], 1
    %s311 = scalar_lea.sflag [#allocation5], 1
    %312 = vsyncpa %s311, 1
    %313 = vsyncpa [#allocation6], 1
    %s314 = scalar_lea.sflag [#allocation6], 1
    %315 = vsyncpa %s314, 1
    %316 = vsyncpa [#allocation9], 1

</llo_original>
